<compile_context>
chip_gen: v7x
topology: tpu7x:2x2x1
jax: 0.10.0
libtpu: 0.0.40
codegen_flags: <defaults>
</compile_context>

<pallas_src>
import math
import functools

import jax
import jax.numpy as jnp
from jax.experimental import pallas as pl
from jax.experimental.pallas import tpu as pltpu


# ---------------------------------------------------------------------------
# In-kernel helpers
# ---------------------------------------------------------------------------

def _gelu(g, approx):
    if approx:
        # tanh approximation -> EUP slot (nearly free on v6e/v7x)
        return jax.nn.gelu(g, approximate=True)
    # exact erf GELU (matches F.gelu default)
    return 0.5 * g * (1.0 + jax.lax.erf(g * jnp.float32(0.7071067811865476)))


def _ff_resident_kernel(x_ref, w1_ref, b1_ref, w2_ref, b2_ref, o_ref, *,
                        inner, approx_gelu):
    """Weights fully resident in VMEM; grid is token tiles only."""
    x = x_ref[...]
    proj = jnp.dot(x, w1_ref[...], preferred_element_type=jnp.float32)
    proj = proj + b1_ref[...].astype(jnp.float32)
    h = proj[:, :inner]
    g = proj[:, inner:]
    inter = (h * _gelu(g, approx_gelu)).astype(w2_ref.dtype)  # Dropout(p=0.0) -> identity
    out = jnp.dot(inter, w2_ref[...], preferred_element_type=jnp.float32)
    o_ref[...] = (out + b2_ref[...].astype(jnp.float32)).astype(o_ref.dtype)


def _ff_tiled_kernel(x_ref, w1_ref, b1_ref, w2_ref, b2_ref, o_ref, acc_ref, *,
                     ti, approx_gelu):
    """Split-K over the inner dimension; grid = (token_tiles, k_steps)."""
    k = pl.program_id(1)

    @pl.when(k == 0)
    def _init():
        acc_ref[...] = jnp.zeros_like(acc_ref)

    x = x_ref[...]
    # w1 block is [h-cols | gate-cols] for this k step (packed by the wrapper).
    proj = jnp.dot(x, w1_ref[...], preferred_element_type=jnp.float32)

    # Biases stay fully resident; slice the matching 2*ti window in-kernel.
    b_start = pl.multiple_of(k * (2 * ti), 2 * ti)
    b1 = b1_ref[:, pl.ds(b_start, 2 * ti)].astype(jnp.float32)
    proj = proj + b1

    h = proj[:, :ti]
    g = proj[:, ti:]
    inter = (h * _gelu(g, approx_gelu)).astype(w2_ref.dtype)

    acc_ref[...] += jnp.dot(inter, w2_ref[...], preferred_element_type=jnp.float32)

    @pl.when(k == pl.num_programs(1) - 1)
    def _finalize():
        # b2 added exactly once, at the last reduction step.
        o_ref[...] = (acc_ref[...] + b2_ref[...].astype(jnp.float32)).astype(o_ref.dtype)


# ---------------------------------------------------------------------------
# Tile / VMEM planning
# ---------------------------------------------------------------------------

def _round_up(x, m):
    return ((x + m - 1) // m) * m


def _vmem_capacity_bytes():
    try:
        return int(pltpu.get_tpu_info().vmem_capacity_bytes)
    except Exception:
        return 64 << 20  # conservative (v7x-sized) fallback


def _pick_inner_tile(inner, ti):
    """Largest lane-aligned (multiple of 128) divisor of `inner` not exceeding ti."""
    ti = min(ti, inner)
    cand = (ti // 128) * 128
    while cand >= 128:
        if inner % cand == 0:
            return cand
        cand -= 128
    return inner  # small inner dims: keep the whole thing per step


def _resident_vmem_bytes(tm, dim, inner, dim_out, w_b, x_b):
    weights = (dim * 2 * inner + 2 * inner + inner * dim_out + dim_out) * w_b
    io = (tm * dim + tm * dim_out) * x_b
    # in-kernel slabs: proj (f32), gelu (f32), inter (compute dtype), out (f32)
    tmp = tm * 2 * inner * 4 + tm * inner * 4 + tm * inner * w_b + tm * dim_out * 4
    return 2 * weights + 2 * io + tmp


def _tiled_vmem_bytes(tm, dim, ti, inner, dim_out, w_b, x_b):
    wslices = (dim * 2 * ti + ti * dim_out) * w_b
    biases = (2 * inner + dim_out) * w_b
    io = (tm * dim + tm * dim_out) * x_b
    acc = tm * dim_out * 4
    tmp = tm * 2 * ti * 4 + tm * ti * 4 + tm * ti * w_b
    return 2 * (wslices + biases + io) + acc + tmp


def _choose_tm(tm_req, n_tokens, sub, fits):
    """Largest token tile (multiple of `sub`, MXU-friendly) that fits the budget."""
    n_cap = _round_up(n_tokens, sub)
    top = max(sub, min(_round_up(tm_req, sub), n_cap))
    cands = sorted(
        {top} | {c for c in (2048, 1536, 1024, 768, 512, 384, 256, 128, 64, 32, 16, 8)
                 if c % sub == 0 and c <= top},
        reverse=True)
    for tm in cands:
        if fits(tm):
            return tm
    return sub


# ---------------------------------------------------------------------------
# Wrapper
# ---------------------------------------------------------------------------

def feed_forward(x, params, *, tm=1024, ti=512, compute_dtype=jnp.bfloat16,
                 approx_gelu=False, weights_resident=None):
    """x: (B, S, dim).  params: dict of pre-transposed weights/biases (see init_params).

    compute_dtype: dtype for x / weights on the MXU (default bf16); accumulation is
    always f32 and the output keeps the original input dtype.
    weights_resident: None = auto (resident when they fit VMEM), True/False forces.
    """
    B, S, dim = x.shape
    orig_dtype = x.dtype
    wh, bh, wg, bg, w2, b2 = (params["wh"], params["bh"], params["wg"],
                              params["bg"], params["w2"], params["b2"])
    if compute_dtype is not None:
        x = x.astype(compute_dtype)
        wh, bh, wg, bg, w2, b2 = (a.astype(compute_dtype)
                                  for a in (wh, bh, wg, bg, w2, b2))

    inner = wh.shape[1]
    dim_out = w2.shape[1]
    out_dtype = orig_dtype

    w_b = jnp.dtype(wh.dtype).itemsize
    x_b = jnp.dtype(x.dtype).itemsize
    sub = {1: 32, 2: 16, 4: 8}.get(x_b, 8)     # sublane pack per dtype

    # --- VMEM budget (generation-aware, includes in-kernel slabs) ---
    cap = _vmem_capacity_bytes()
    budget = max(int(0.80 * cap), 32 << 20)

    N = B * S
    x2 = x.reshape(N, dim)

    # --- path + tile selection ---
    ti_eff = _pick_inner_tile(inner, ti)
    k_steps = inner // ti_eff

    def fits_res(t):
        return _resident_vmem_bytes(t, dim, inner, dim_out, w_b, x_b) <= budget

    def fits_tiled(t):
        return _tiled_vmem_bytes(t, dim, ti_eff, inner, dim_out, w_b, x_b) <= budget

    tm_res = _choose_tm(tm, N, sub, fits_res)
    if weights_resident is None:
        use_resident = fits_res(tm_res) and tm_res >= min(256, _round_up(N, sub))
    else:
        use_resident = bool(weights_resident) and fits_res(tm_res)

    tm_eff = tm_res if use_resident else _choose_tm(tm, N, sub, fits_tiled)

    # Megacore: keep >=2 token tiles when N is big enough (v7x has 2 TCs).
    N_pad = _round_up(N, tm_eff)
    if N_pad // tm_eff < 2 and tm_eff >= 2 * max(sub, 128):
        tm_eff = max(sub, _round_up((N + 1) // 2, sub))
        N_pad = _round_up(N, tm_eff)

    if N_pad != N:
        x2 = jnp.pad(x2, ((0, N_pad - N), (0, 0)))

    # --- pack W_h|W_gate into one array (one DMA block / one MXU stream per step) ---
    if use_resident:
        w1 = jnp.concatenate([wh, wg], axis=1)
        b1 = jnp.concatenate([bh, bg], axis=1)
    else:
        # per-k-block layout: [wh block k | wg block k], each ti_eff wide
        w1 = jnp.concatenate(
            [wh.reshape(dim, k_steps, ti_eff), wg.reshape(dim, k_steps, ti_eff)],
            axis=2).reshape(dim, 2 * inner)
        b1 = jnp.concatenate(
            [bh.reshape(1, k_steps, ti_eff), bg.reshape(1, k_steps, ti_eff)],
            axis=2).reshape(1, 2 * inner)

    if use_resident:
        kern = functools.partial(_ff_resident_kernel, inner=inner,
                                 approx_gelu=approx_gelu)
        grid_spec = pltpu.PrefetchScalarGridSpec(
            num_scalar_prefetch=0,
            grid=(N_pad // tm_eff,),
            in_specs=[
                pl.BlockSpec((tm_eff, dim), lambda i: (i, 0)),        # x tile
                pl.BlockSpec((dim, 2 * inner), lambda i: (0, 0)),     # W1 (resident)
                pl.BlockSpec((1, 2 * inner), lambda i: (0, 0)),       # b1 (resident)
                pl.BlockSpec((inner, dim_out), lambda i: (0, 0)),     # W2 (resident)
                pl.BlockSpec((1, dim_out), lambda i: (0, 0)),         # b2 (resident)
            ],
            out_specs=pl.BlockSpec((tm_eff, dim_out), lambda i: (i, 0)),
            scratch_shapes=[],
        )
        dim_sem = ("parallel",)
    else:
        kern = functools.partial(_ff_tiled_kernel, ti=ti_eff,
                                 approx_gelu=approx_gelu)
        grid_spec = pltpu.PrefetchScalarGridSpec(
            num_scalar_prefetch=0,
            grid=(N_pad // tm_eff, k_steps),
            in_specs=[
                pl.BlockSpec((tm_eff, dim), lambda i, k: (i, 0)),       # x tile (resident across k)
                pl.BlockSpec((dim, 2 * ti_eff), lambda i, k: (0, k)),   # packed W1 slice
                pl.BlockSpec((1, 2 * inner), lambda i, k: (0, 0)),      # b1 (resident, sliced in-kernel)
                pl.BlockSpec((ti_eff, dim_out), lambda i, k: (k, 0)),   # W2 slice
                pl.BlockSpec((1, dim_out), lambda i, k: (0, 0)),        # b2 (resident)
            ],
            out_specs=pl.BlockSpec((tm_eff, dim_out), lambda i, k: (i, 0)),
            scratch_shapes=[pltpu.VMEM((tm_eff, dim_out), jnp.float32)],
        )
        dim_sem = ("parallel", "arbitrary")

    out = pl.pallas_call(
        kern,
        out_shape=jax.ShapeDtypeStruct((N_pad, dim_out), out_dtype),
        grid_spec=grid_spec,
        compiler_params=pltpu.CompilerParams(
            dimension_semantics=dim_sem,
            vmem_limit_bytes=int(budget),
        ),
    )(x2, w1, b1, w2, b2)

    if N_pad != N:
        out = out[:N]
    return out.reshape(B, S, dim_out)


# ---------------------------------------------------------------------------
# Params + reference
# ---------------------------------------------------------------------------

def init_params(key, dim, dim_out=None, mult=4, dtype=jnp.float32):
    """Deterministic init mimicking nn.Linear defaults (uniform +/- 1/sqrt(fan_in))."""
    inner = int(dim * mult)
    dim_out = dim_out if dim_out is not None else dim
    k = jax.random.split(key, 6)

    bound1 = 1.0 / math.sqrt(dim)
    bound2 = 1.0 / math.sqrt(inner)
    # nn.Linear(dim, 2*inner): chunk(2, -1) -> first half = hidden, second half = gate
    wh = jax.random.uniform(k[0], (dim, inner), dtype, -bound1, bound1)
    wg = jax.random.uniform(k[1], (dim, inner), dtype, -bound1, bound1)
    bh = jax.random.uniform(k[2], (1, inner), dtype, -bound1, bound1)
    bg = jax.random.uniform(k[3], (1, inner), dtype, -bound1, bound1)
    # nn.Linear(inner, dim_out)
    w2 = jax.random.uniform(k[4], (inner, dim_out), dtype, -bound2, bound2)
    b2 = jax.random.uniform(k[5], (1, dim_out), dtype, -bound2, bound2)
    return dict(wh=wh, bh=bh, wg=wg, bg=bg, w2=w2, b2=b2)


def _reference(x, p):
    """Pure-JAX f32 reference for sanity checking."""
    h = x @ p["wh"] + p["bh"][0]
    g = x @ p["wg"] + p["bg"][0]
    gelu_g = 0.5 * g * (1.0 + jax.lax.erf(g / jnp.sqrt(2.0)))
    return (h * gelu_g) @ p["w2"] + p["b2"][0]


# TODO(synk): Dropout with p > 0 (training mode) is not implemented; the module
# default p=0.0 makes it an identity, which is what this kernel fuses.

if __name__ == "__main__":
    key = jax.random.PRNGKey(0)
    kx1, kx2, kp1, kp2 = jax.random.split(key, 4)

    # Test 1: default path (bf16 compute, auto weights-resident), odd token count
    # exercises the pad-to-tile path.
    B, S, dim, mult = 2, 7, 32, 4            # inner = 128
    x1 = jax.random.normal(kx1, (B, S, dim), jnp.float32)
    p1 = init_params(kp1, dim, mult=mult)
    ff1 = jax.jit(feed_forward)
    y1 = jax.block_until_ready(ff1(x1, p1))
    y1_ref = _reference(x1, p1)
    assert y1.shape == (B, S, dim)
    # bf16 matmuls -> loosened tolerance vs. the f32 reference
    assert jnp.allclose(y1, y1_ref, atol=1e-1, rtol=5e-2), "bf16 resident path mismatch"

    # Test 2: forced split-K tiled path in f32 with multiple reduction steps.
    B2, S2, dim2, mult2 = 2, 16, 32, 8       # inner = 256, ti=128 -> 2 k-steps
    x2 = jax.random.normal(kx2, (B2, S2, dim2), jnp.float32)
    p2 = init_params(kp2, dim2, mult=mult2)
    ff2 = jax.jit(functools.partial(feed_forward, compute_dtype=None,
                                    weights_resident=False, tm=256, ti=128))
    y2 = jax.block_until_ready(ff2(x2, p2))
    y2_ref = _reference(x2, p2)
    assert y2.shape == (B2, S2, dim2)
    assert jnp.allclose(y2, y2_ref, atol=1e-4, rtol=1e-4), "f32 tiled path mismatch"

    print("KERNEL_OK")
</pallas_src>

<mosaic_0001>
module attributes {stable_mosaic.version = 11 : i64} {
  func.func @_ff_resident_kernel(%arg0: i32, %arg1: memref<16x32xbf16, #tpu.memory_space<vmem>>, %arg2: memref<32x256xbf16, #tpu.memory_space<vmem>>, %arg3: memref<1x256xbf16, #tpu.memory_space<vmem>>, %arg4: memref<128x32xbf16, #tpu.memory_space<vmem>>, %arg5: memref<1x32xbf16, #tpu.memory_space<vmem>>, %arg6: memref<16x32xf32, #tpu.memory_space<vmem>>) attributes {dimension_semantics = [#tpu.dimension_semantics<parallel>], iteration_bounds = array<i64: 1>, scalar_prefetch = 0 : i64, scratch_operands = 0 : i64, tpu.core_type = #tpu.core_type<tc>, window_params = [{transform_indices = @transform_0, window_bounds = array<i64: 16, 32>}, {pipeline_mode = #tpu.pipeline_mode<synchronous>, transform_indices = @transform_1, window_bounds = array<i64: 32, 256>}, {pipeline_mode = #tpu.pipeline_mode<synchronous>, transform_indices = @transform_2, window_bounds = array<i64: 1, 256>}, {pipeline_mode = #tpu.pipeline_mode<synchronous>, transform_indices = @transform_3, window_bounds = array<i64: 128, 32>}, {pipeline_mode = #tpu.pipeline_mode<synchronous>, transform_indices = @transform_4, window_bounds = array<i64: 1, 32>}, {transform_indices = @transform_5, window_bounds = array<i64: 16, 32>}]} {
    %c0 = arith.constant 0 : index
    %c0_0 = arith.constant 0 : index
    %0 = vector.load %arg1[%c0, %c0_0] : memref<16x32xbf16, #tpu.memory_space<vmem>>, vector<16x32xbf16>
    %c0_1 = arith.constant 0 : index
    %c0_2 = arith.constant 0 : index
    %1 = vector.load %arg2[%c0_1, %c0_2] : memref<32x256xbf16, #tpu.memory_space<vmem>>, vector<32x256xbf16>
    %cst = arith.constant dense<0.000000e+00> : vector<16x256xf32>
    %2 = tpu.matmul %0, %1, %cst {dimension_numbers = #tpu.dot_dimension_numbers<[1], [0], [0], [1], [0, 0, 1, 1], [], []>} : vector<16x32xbf16>, vector<32x256xbf16>, vector<16x256xf32> -> vector<16x256xf32>
    %c0_3 = arith.constant 0 : index
    %c0_4 = arith.constant 0 : index
    %3 = vector.load %arg3[%c0_3, %c0_4] : memref<1x256xbf16, #tpu.memory_space<vmem>>, vector<1x256xbf16>
    %4 = arith.extf %3 : vector<1x256xbf16> to vector<1x256xf32>
    %5 = vector.broadcast %4 : vector<1x256xf32> to vector<16x256xf32>
    %6 = arith.addf %2, %5 : vector<16x256xf32>
    %7 = vector.extract_strided_slice %6 {offsets = [0, 0], sizes = [16, 128], strides = [1, 1]} : vector<16x256xf32> to vector<16x128xf32>
    %8 = vector.extract_strided_slice %6 {offsets = [0, 128], sizes = [16, 128], strides = [1, 1]} : vector<16x256xf32> to vector<16x128xf32>
    %cst_5 = arith.constant 5.000000e-01 : f32
    %9 = vector.broadcast %cst_5 : f32 to vector<16x128xf32>
    %10 = arith.mulf %9, %8 : vector<16x128xf32>
    %cst_6 = arith.constant 0.707106769 : f32
    %11 = vector.broadcast %cst_6 : f32 to vector<16x128xf32>
    %12 = arith.mulf %8, %11 : vector<16x128xf32>
    %13 = math.erf %12 : vector<16x128xf32>
    %cst_7 = arith.constant 1.000000e+00 : f32
    %14 = vector.broadcast %cst_7 : f32 to vector<16x128xf32>
    %15 = arith.addf %14, %13 : vector<16x128xf32>
    %16 = arith.mulf %10, %15 : vector<16x128xf32>
    %17 = arith.mulf %7, %16 : vector<16x128xf32>
    %18 = arith.truncf %17 : vector<16x128xf32> to vector<16x128xbf16>
    %c0_8 = arith.constant 0 : index
    %c0_9 = arith.constant 0 : index
    %19 = vector.load %arg4[%c0_8, %c0_9] : memref<128x32xbf16, #tpu.memory_space<vmem>>, vector<128x32xbf16>
    %cst_10 = arith.constant dense<0.000000e+00> : vector<16x32xf32>
    %20 = tpu.matmul %18, %19, %cst_10 {dimension_numbers = #tpu.dot_dimension_numbers<[1], [0], [0], [1], [0, 0, 1, 1], [], []>} : vector<16x128xbf16>, vector<128x32xbf16>, vector<16x32xf32> -> vector<16x32xf32>
    %c0_11 = arith.constant 0 : index
    %c0_12 = arith.constant 0 : index
    %21 = vector.load %arg5[%c0_11, %c0_12] : memref<1x32xbf16, #tpu.memory_space<vmem>>, vector<1x32xbf16>
    %22 = arith.extf %21 : vector<1x32xbf16> to vector<1x32xf32>
    %23 = vector.broadcast %22 : vector<1x32xf32> to vector<16x32xf32>
    %24 = arith.addf %20, %23 : vector<16x32xf32>
    %c0_13 = arith.constant 0 : index
    %c0_14 = arith.constant 0 : index
    %25 = vector.load %arg6[%c0_13, %c0_14] : memref<16x32xf32, #tpu.memory_space<vmem>>, vector<16x32xf32>
    tpu.vector_store %arg6[%c0_13, %c0_14], %24 {strides = array<i32>} : memref<16x32xf32, #tpu.memory_space<vmem>>, vector<16x32xf32>,
    return
  }
  func.func @transform_0(%arg0: i32) -> (i32, i32) {
    %c0_i32 = arith.constant 0 : i32
    %c0_i32_0 = arith.constant 0 : i32
    return %arg0, %c0_i32 : i32, i32
  }
  func.func @transform_1(%arg0: i32) -> (i32, i32) {
    %c0_i32 = arith.constant 0 : i32
    %c0_i32_0 = arith.constant 0 : i32
    %c0_i32_1 = arith.constant 0 : i32
    return %c0_i32, %c0_i32_0 : i32, i32
  }
  func.func @transform_2(%arg0: i32) -> (i32, i32) {
    %c0_i32 = arith.constant 0 : i32
    %c0_i32_0 = arith.constant 0 : i32
    %c0_i32_1 = arith.constant 0 : i32
    return %c0_i32, %c0_i32_0 : i32, i32
  }
  func.func @transform_3(%arg0: i32) -> (i32, i32) {
    %c0_i32 = arith.constant 0 : i32
    %c0_i32_0 = arith.constant 0 : i32
    %c0_i32_1 = arith.constant 0 : i32
    return %c0_i32, %c0_i32_0 : i32, i32
  }
  func.func @transform_4(%arg0: i32) -> (i32, i32) {
    %c0_i32 = arith.constant 0 : i32
    %c0_i32_0 = arith.constant 0 : i32
    %c0_i32_1 = arith.constant 0 : i32
    return %c0_i32, %c0_i32_0 : i32, i32
  }
  func.func @transform_5(%arg0: i32) -> (i32, i32) {
    %c0_i32 = arith.constant 0 : i32
    %c0_i32_0 = arith.constant 0 : i32
    return %arg0, %c0_i32 : i32, i32
  }
}

</mosaic_0001>

<llo_original>
// kernel: feed_forward.1
$region0: #{feed_forward.1}
  #allocation0 [shape = 'u32[]', space=smem, size = 0x4, offset = 0x4, fixed_abs, tag = 'smem constant byte address 0x4 - core index']
  #allocation1 [shape = 'u32[144,128]{1,0:T(1,128)}', space=vmem, size = 0x12000, scoped, tag = 'internal scratch']
  %s0 = inlined_call_operand.vmem [shape: bf16[16,32], index: 0, kind: input, shape index: {}]
  %s1 = inlined_call_operand.vmem [shape: bf16[32,256], index: 1, kind: input, shape index: {}]
  %s2 = inlined_call_operand.vmem [shape: bf16[1,256], index: 2, kind: input, shape index: {}]
  %s3 = inlined_call_operand.vmem [shape: bf16[128,32], index: 3, kind: input, shape index: {}]
  %s4 = inlined_call_operand.vmem [shape: bf16[1,32], index: 4, kind: input, shape index: {}]
  %s5 = inlined_call_operand.vmem [shape: f32[16,32], index: 5, kind: output, shape index: {}]
  %s6 = sld [smem:[#allocation0]]
  $region30: #{feed_forward.1} parent=0
    _
  %s8 = ssub.s32 1, %s6
  %s9 = scalar_select 0, %s8, %s6
  // Predicated region
  $region2: #{feed_forward.1} parent=0 // pred_check
    _
  $region3: #{feed_forward.1} parent=0 // pred_check_branch
    %11 = sbr.rel (0) target = $region5
  $region4: #{feed_forward.1} parent=0 // pred_region
    _
  $region5: #{feed_forward.1} parent=0 // pred_fallthru
    _
  // Predicated region
  $region6: #{feed_forward.1} parent=0 // pred_check
    _
  $region7: #{feed_forward.1} parent=0 // pred_check_branch
    %13 = sbr.rel (0) target = $region9
  $region8: #{feed_forward.1} parent=0 // pred_region
    _
  $region9: #{feed_forward.1} parent=0 // pred_fallthru
    _
  // Predicated region
  $region10: #{feed_forward.1} parent=0 // pred_check
    _
  $region11: #{feed_forward.1} parent=0 // pred_check_branch
    %15 = sbr.rel (0) target = $region13
  $region12: #{feed_forward.1} parent=0 // pred_region
    _
  $region13: #{feed_forward.1} parent=0 // pred_fallthru
    _
  // Predicated region
  $region14: #{feed_forward.1} parent=0 // pred_check
    _
  $region15: #{feed_forward.1} parent=0 // pred_check_branch
    %17 = sbr.rel (0) target = $region17
  $region16: #{feed_forward.1} parent=0 // pred_region
    _
  $region17: #{feed_forward.1} parent=0 // pred_fallthru
    _
  // Predicated region
  $region18: #{feed_forward.1} parent=0 // pred_check
    _
  $region19: #{feed_forward.1} parent=0 // pred_check_branch
    %19 = sbr.rel (0) target = $region21
  $region20: #{feed_forward.1} parent=0 // pred_region
    _
  $region21: #{feed_forward.1} parent=0 // pred_fallthru
    _
  %v21 = vld [vmem:[%s0] sm:$0xf]
  %v22 = vld [vmem:[%s0 + $0x4] sm:$0xf]
  %v23 = vld [vmem:[%s1] sm:$0xff]
  %v24 = vld [vmem:[%s1 + $0x8] sm:$0xff]
  %v25 = vld [vmem:[%s1 + $0x10] sm:$0xff]
  %v26 = vld [vmem:[%s1 + $0x18] sm:$0xff]
  %v27 = vld [vmem:[%s2] sm:$0x3]
  %v28 = vunpack.c.l.bf16 %v27
  %v30 = vlaneseq
  %v31 = vshrl.u32 %v30, 7
  %v32 = vsub.s32 0, %v31
  %v33 = vrot.slane %v28, %v32
  %v34 = vlaneseq
  %v35 = vshrl.u32 %v34, 7
  %v36 = vsub.s32 2, %v35
  %v37 = vrot.slane %v28, %v36
  %v40 = vlaneseq
  %v41 = vshrl.u32 %v40, 7
  %v42 = vsub.s32 0, %v41
  %v43 = vrot.slane %v33, %v42
  %v44 = vlaneseq
  %v45 = vshrl.u32 %v44, 7
  %v46 = vsub.s32 0, %v45
  %v47 = vrot.slane %v37, %v46
  %v50 = vunpack.c.l.b16 %v21
  %v51 = vunpack.c.l.b16 %v22
  %v52 = vpack.c.b16 %v51, %v50
  %v57 = vunpack.c.l.b16 %v23
  %v58 = vunpack.c.h.b16 %v23
  %v59 = vunpack.c.l.b16 %v24
  %v60 = vunpack.c.h.b16 %v24
  %v61 = vunpack.c.l.b16 %v25
  %v62 = vunpack.c.h.b16 %v25
  %v63 = vunpack.c.l.b16 %v26
  %v64 = vunpack.c.h.b16 %v26
  %v65 = vpack.c.b16 %v59, %v57
  %v66 = vpack.c.b16 %v60, %v58
  %v67 = vpack.c.b16 %v63, %v61
  %v68 = vpack.c.b16 %v64, %v62
  %vm73 = vcmask 261120
  %v75 = vsel %vm73, %v52, 0
  %77 = vmatprep.subr.bf16.mxu0 %v66
  %78 = vmatpush1.bf16.msra.mxu0 %v65
  %79 = vmatprep.subr.bf16.mxu0 %v68
  %80 = vmatpush1.bf16.msra.mxu0 %v67
  %81 = vmatprep.subr.bf16.mxu0 0
  %82 = vmatpush1.bf16.msra.mxu0 0
  %83 = vmatprep.subr.bf16.mxu0 0
  %84 = vmatpush1.bf16.msra.mxu0 0
  %85 = vmatprep.subr.bf16.mxu0 0
  %86 = vmatpush1.bf16.msra.mxu0 0
  %87 = vmatprep.subr.bf16.mxu0 0
  %88 = vmatpush1.bf16.msra.mxu0 0
  %89 = vmatprep.subr.bf16.mxu0 0
  %90 = vmatpush1.bf16.msra.mxu0 0
  %91 = vmatprep.subr.bf16.mxu0 0
  %92 = vmatpush1.bf16.msra.mxu0 0
  %93 = vmatprep.subr.bf16.mxu0 0
  %94 = vmatpush1.bf16.msra.mxu0 0
  %95 = vmatprep.subr.bf16.mxu0 0
  %96 = vmatpush1.bf16.msra.mxu0 0
  %97 = vmatprep.subr.bf16.mxu0 0
  %98 = vmatpush1.bf16.msra.mxu0 0
  %99 = vmatprep.subr.bf16.mxu0 0
  %100 = vmatpush1.bf16.msra.mxu0 0
  %101 = vmatprep.subr.bf16.mxu0 0
  %102 = vmatpush1.bf16.msra.mxu0 0
  %103 = vmatprep.subr.bf16.mxu0 0
  %104 = vmatpush1.bf16.msra.mxu0 0
  %105 = vmatprep.subr.bf16.mxu0 0
  %106 = vmatpush1.bf16.msra.mxu0 0
  %107 = vmatprep.subr.bf16.mxu0 0
  %108 = vmatpush1.bf16.msra.mxu0 0
  %109 = vmatprep.mubr.bf16.mxu0 0
  %110 = vmatmul.mubr.bf16.gmra.mrb[0].mxu0 %v75
  %v111 = vpop.f32.mrb[0].mxu0
  %v112 = vadd.f32 %v43, %v111
  %v113 = vpop.f32.mrb[0].mxu0
  %v114 = vadd.f32 %v47, %v113
  %v115 = vpop.f32.mrb[0].mxu0
  %v116 = vadd.f32 %v43, %v115
  %v117 = vpop.f32.mrb[0].mxu0
  %v118 = vadd.f32 %v47, %v117
  %119 = vdwg.mxu0
  %v120 = vmul.f32 %v114, 0.5
  %v121 = vmul.f32 %v118, 0.5
  %v122 = vmul.f32 %v114, 0.70710677
  %v123 = vmul.f32 %v118, 0.70710677
  %v124 = verf.f32.pop %v122
  %v125 = verf.f32.pop %v123
  %v126 = vadd.f32 %v124, 1.0
  %v127 = vadd.f32 %v125, 1.0
  %v128 = vmul.f32 %v120, %v126
  %v129 = vmul.f32 %v121, %v127
  %v130 = vmul.f32 %v112, %v128
  %v131 = vmul.f32 %v116, %v129
  %v132 = vpack.c.bf16 %v131, %v130
  %v133 = vld [vmem:[%s3] sm:$0xf]
  %v134 = vld [vmem:[%s3 + $0x4] sm:$0xf]
  %v135 = vld [vmem:[%s3 + $0x8] sm:$0xf]
  %v136 = vld [vmem:[%s3 + $0xc] sm:$0xf]
  %v137 = vld [vmem:[%s3 + $0x10] sm:$0xf]
  %v138 = vld [vmem:[%s3 + $0x14] sm:$0xf]
  %v139 = vld [vmem:[%s3 + $0x18] sm:$0xf]
  %v140 = vld [vmem:[%s3 + $0x1c] sm:$0xf]
  %v141 = vld [vmem:[%s3 + $0x20] sm:$0xf]
  %v142 = vld [vmem:[%s3 + $0x24] sm:$0xf]
  %v143 = vld [vmem:[%s3 + $0x28] sm:$0xf]
  %v144 = vld [vmem:[%s3 + $0x2c] sm:$0xf]
  %v145 = vld [vmem:[%s3 + $0x30] sm:$0xf]
  %v146 = vld [vmem:[%s3 + $0x34] sm:$0xf]
  %v147 = vld [vmem:[%s3 + $0x38] sm:$0xf]
  %v148 = vld [vmem:[%s3 + $0x3c] sm:$0xf]
  %v149 = vld [vmem:[%s4] sm:$0x1]
  %v150 = vunpack.c.l.bf16 %v149
  %v151 = vlaneseq
  %v152 = vshrl.u32 %v151, 7
  %v153 = vsub.s32 0, %v152
  %v154 = vrot.slane %v150, %v153
  %v171 = vunpack.c.l.b16 %v133
  %v172 = vunpack.c.l.b16 %v134
  %v173 = vunpack.c.l.b16 %v135
  %v174 = vunpack.c.l.b16 %v136
  %v175 = vunpack.c.l.b16 %v137
  %v176 = vunpack.c.l.b16 %v138
  %v177 = vunpack.c.l.b16 %v139
  %v178 = vunpack.c.l.b16 %v140
  %v179 = vunpack.c.l.b16 %v141
  %v180 = vunpack.c.l.b16 %v142
  %v181 = vunpack.c.l.b16 %v143
  %v182 = vunpack.c.l.b16 %v144
  %v183 = vunpack.c.l.b16 %v145
  %v184 = vunpack.c.l.b16 %v146
  %v185 = vunpack.c.l.b16 %v147
  %v186 = vunpack.c.l.b16 %v148
  %v187 = vpack.c.b16 %v172, %v171
  %v188 = vpack.c.b16 %v174, %v173
  %v189 = vpack.c.b16 %v176, %v175
  %v190 = vpack.c.b16 %v178, %v177
  %v191 = vpack.c.b16 %v180, %v179
  %v192 = vpack.c.b16 %v182, %v181
  %v193 = vpack.c.b16 %v184, %v183
  %v194 = vpack.c.b16 %v186, %v185
  %203 = vmatprep.subr.bf16.mxu0 0
  %204 = vmatpush1.bf16.msra.mxu0 %v187
  %205 = vmatprep.subr.bf16.mxu0 0
  %206 = vmatpush1.bf16.msra.mxu0 %v188
  %207 = vmatprep.subr.bf16.mxu0 0
  %208 = vmatpush1.bf16.msra.mxu0 %v189
  %209 = vmatprep.subr.bf16.mxu0 0
  %210 = vmatpush1.bf16.msra.mxu0 %v190
  %211 = vmatprep.subr.bf16.mxu0 0
  %212 = vmatpush1.bf16.msra.mxu0 %v191
  %213 = vmatprep.subr.bf16.mxu0 0
  %214 = vmatpush1.bf16.msra.mxu0 %v192
  %215 = vmatprep.subr.bf16.mxu0 0
  %216 = vmatpush1.bf16.msra.mxu0 %v193
  %217 = vmatprep.subr.bf16.mxu0 0
  %218 = vmatpush1.bf16.msra.mxu0 %v194
  %219 = vmatprep.subr.bf16.mxu0 0
  %220 = vmatpush1.bf16.msra.mxu0 0
  %221 = vmatprep.subr.bf16.mxu0 0
  %222 = vmatpush1.bf16.msra.mxu0 0
  %223 = vmatprep.subr.bf16.mxu0 0
  %224 = vmatpush1.bf16.msra.mxu0 0
  %225 = vmatprep.subr.bf16.mxu0 0
  %226 = vmatpush1.bf16.msra.mxu0 0
  %227 = vmatprep.subr.bf16.mxu0 0
  %228 = vmatpush1.bf16.msra.mxu0 0
  %229 = vmatprep.subr.bf16.mxu0 0
  %230 = vmatpush1.bf16.msra.mxu0 0
  %231 = vmatprep.subr.bf16.mxu0 0
  %232 = vmatpush1.bf16.msra.mxu0 0
  %233 = vmatprep.subr.bf16.mxu0 0
  %234 = vmatpush1.bf16.msra.mxu0 0
  %235 = vmatprep.mubr.bf16.mxu0 0
  %236 = vmatmul.mubr.bf16.gmra.mrb[0].mxu0 %v132
  %v237 = vpop.f32.mrb[0].mxu0
  %v238 = vadd.f32 %v154, %v237
  %v239 = vpop.f32.mrb[0].mxu0
  %v240 = vpop.f32.mrb[0].mxu0
  %v241 = vadd.f32 %v154, %v240
  %v242 = vpop.f32.mrb[0].mxu0
  %243 = vdwg.mxu0
  %244 = vst.msk [vmem:[%s5] sm:$0xff] %vm73, %v238
  %245 = vst.msk [vmem:[%s5 + $0x8] sm:$0xff] %vm73, %v241
  // Predicated region
  $region22: #{feed_forward.1} parent=0 // pred_check
    _
  $region23: #{feed_forward.1} parent=0 // pred_check_branch
    %247 = sbr.rel (0) target = $region25
  $region24: #{feed_forward.1} parent=0 // pred_region
    _
  $region25: #{feed_forward.1} parent=0 // pred_fallthru
    _
  // Predicated region
  $region26: #{feed_forward.1} parent=0 // pred_check
    _
  $region27: #{feed_forward.1} parent=0 // pred_check_branch
    %249 = sbr.rel (0) target = $region29
  $region28: #{feed_forward.1} parent=0 // pred_region
    _
  $region29: #{feed_forward.1} parent=0 // pred_fallthru
    _

</llo_original>
